<compile_context>
chip_gen: v7x
topology: tpu7x:2x2x1
jax: 0.10.0
libtpu: 0.0.40
codegen_flags: <defaults>
</compile_context>

<pallas_src>
import jax
import jax.numpy as jnp
from jax.experimental import pallas as pl
from jax.experimental.pallas import tpu as pltpu  # noqa: F401  (TPU backend)

BASE_SIZE = 4.0


def _anchors_kernel(packed_ref, out_ref):
    # packed_ref: (2, N) f32  row 0 = ratios[i // S], row 1 = scales[i % S]
    # out_ref:    (4, N) f32  rows = [x_min, y_min, x_max, y_max]
    rr = packed_ref[0:1, :]                       # (1, N)
    ss = packed_ref[1:2, :]                       # (1, N)

    h_ratios = jnp.sqrt(rr)                       # (1, N)
    w_ratios = jax.lax.rsqrt(rr)                  # (1, N)  EUP, exact rsqrt

    ws = BASE_SIZE * w_ratios * ss                # (1, N)
    hs = BASE_SIZE * h_ratios * ss                # (1, N)

    # shared half-extents: 0.5*(ws-1) / 0.5*(hs-1)
    half_w = 0.5 * ws - 0.5
    half_h = 0.5 * hs - 0.5

    ctr = 0.5 * (BASE_SIZE - 1.0)                 # x_ctr == y_ctr

    out_ref[...] = jnp.round(
        jnp.concatenate(
            [ctr - half_w, ctr - half_h, ctr + half_w, ctr + half_h],
            axis=0,
        )
    )


def gen_base_anchors_pallas(ratios: jax.Array, scales: jax.Array) -> jax.Array:
    """ratios: (R,) f32, scales: (S,) f32 -> (R*S, 4) f32 anchors."""
    ratios = ratios.astype(jnp.float32)
    scales = scales.astype(jnp.float32)
    R = ratios.shape[0]
    S = scales.shape[0]
    N = R * S

    # Layout plumbing only (no arithmetic): expand the outer-product index
    # structure so the kernel sees a single lane-dense (2, N) input -> 1 DMA.
    r_flat = jnp.repeat(ratios, S)                # ratios[i // S]
    s_flat = jnp.tile(scales, R)                  # scales[i % S]
    packed = jnp.stack([r_flat, s_flat], axis=0)  # (2, N)

    out = pl.pallas_call(
        _anchors_kernel,
        out_shape=jax.ShapeDtypeStruct((4, N), jnp.float32),
    )(packed)

    # glue: (4, N) -> (N, 4), matching torch stack(dim=-1) on flattened ws/hs
    return out.T


def _reference(ratios, scales, base_size=4):
    # pure-JAX reference mirroring the PyTorch code
    w = h = float(base_size)
    x_ctr = 0.5 * (w - 1)
    y_ctr = 0.5 * (h - 1)
    h_ratios = jnp.sqrt(ratios)
    w_ratios = 1.0 / h_ratios
    ws = (w * w_ratios[:, None] * scales[None, :]).reshape(-1)
    hs = (h * h_ratios[:, None] * scales[None, :]).reshape(-1)
    return jnp.round(
        jnp.stack(
            [x_ctr - 0.5 * (ws - 1), y_ctr - 0.5 * (hs - 1),
             x_ctr + 0.5 * (ws - 1), y_ctr + 0.5 * (hs - 1)],
            axis=-1,
        )
    )


if __name__ == "__main__":
    key = jax.random.PRNGKey(0)
    k1, k2 = jax.random.split(key)
    # typical anchor-generator inputs: a few aspect ratios and scales
    ratios = jax.random.uniform(k1, (3,), jnp.float32, minval=0.5, maxval=2.0)
    scales = jax.random.uniform(k2, (4,), jnp.float32, minval=4.0, maxval=32.0)

    anchors = jax.jit(gen_base_anchors_pallas)(ratios, scales)
    jax.block_until_ready(anchors)

    ref = _reference(ratios, scales)
    assert anchors.shape == (ratios.shape[0] * scales.shape[0], 4)
    assert jnp.allclose(anchors, ref, atol=1e-5), (anchors, ref)

    print("KERNEL_OK")
</pallas_src>

<mosaic_0001>
module attributes {stable_mosaic.version = 11 : i64} {
  func.func @_anchors_kernel(%arg0: memref<2x12xf32, #tpu.memory_space<vmem>>, %arg1: memref<4x12xf32, #tpu.memory_space<vmem>>) attributes {dimension_semantics = [], scalar_prefetch = 0 : i64, scratch_operands = 0 : i64, tpu.core_type = #tpu.core_type<tc>} {
    %c0 = arith.constant 0 : index
    %c0_0 = arith.constant 0 : index
    %0 = vector.load %arg0[%c0, %c0_0] : memref<2x12xf32, #tpu.memory_space<vmem>>, vector<1x12xf32>
    %c1 = arith.constant 1 : index
    %c0_1 = arith.constant 0 : index
    %1 = vector.load %arg0[%c1, %c0_1] : memref<2x12xf32, #tpu.memory_space<vmem>>, vector<1x12xf32>
    %2 = math.sqrt %0 : vector<1x12xf32>
    %3 = math.rsqrt %0 : vector<1x12xf32>
    %cst = arith.constant 4.000000e+00 : f32
    %4 = vector.broadcast %cst : f32 to vector<1x12xf32>
    %5 = arith.mulf %4, %3 : vector<1x12xf32>
    %6 = arith.mulf %5, %1 : vector<1x12xf32>
    %cst_2 = arith.constant 4.000000e+00 : f32
    %7 = vector.broadcast %cst_2 : f32 to vector<1x12xf32>
    %8 = arith.mulf %7, %2 : vector<1x12xf32>
    %9 = arith.mulf %8, %1 : vector<1x12xf32>
    %cst_3 = arith.constant 5.000000e-01 : f32
    %10 = vector.broadcast %cst_3 : f32 to vector<1x12xf32>
    %11 = arith.mulf %10, %6 : vector<1x12xf32>
    %cst_4 = arith.constant 5.000000e-01 : f32
    %12 = vector.broadcast %cst_4 : f32 to vector<1x12xf32>
    %13 = arith.subf %11, %12 : vector<1x12xf32>
    %cst_5 = arith.constant 5.000000e-01 : f32
    %14 = vector.broadcast %cst_5 : f32 to vector<1x12xf32>
    %15 = arith.mulf %14, %9 : vector<1x12xf32>
    %cst_6 = arith.constant 5.000000e-01 : f32
    %16 = vector.broadcast %cst_6 : f32 to vector<1x12xf32>
    %17 = arith.subf %15, %16 : vector<1x12xf32>
    %cst_7 = arith.constant 1.500000e+00 : f32
    %18 = vector.broadcast %cst_7 : f32 to vector<1x12xf32>
    %19 = arith.subf %18, %13 : vector<1x12xf32>
    %cst_8 = arith.constant 1.500000e+00 : f32
    %20 = vector.broadcast %cst_8 : f32 to vector<1x12xf32>
    %21 = arith.subf %20, %17 : vector<1x12xf32>
    %cst_9 = arith.constant 1.500000e+00 : f32
    %22 = vector.broadcast %cst_9 : f32 to vector<1x12xf32>
    %23 = arith.addf %22, %13 : vector<1x12xf32>
    %cst_10 = arith.constant 1.500000e+00 : f32
    %24 = vector.broadcast %cst_10 : f32 to vector<1x12xf32>
    %25 = arith.addf %24, %17 : vector<1x12xf32>
    %26 = tpu.concatenate %19, %21, %23, %25 in 0 : vector<1x12xf32>, vector<1x12xf32>, vector<1x12xf32>, vector<1x12xf32> -> vector<4x12xf32>
    %27 = math.roundeven %26 : vector<4x12xf32>
    %c0_11 = arith.constant 0 : index
    %c0_12 = arith.constant 0 : index
    %28 = vector.load %arg1[%c0_11, %c0_12] : memref<4x12xf32, #tpu.memory_space<vmem>>, vector<4x12xf32>
    tpu.vector_store %arg1[%c0_11, %c0_12], %27 {strides = array<i32>} : memref<4x12xf32, #tpu.memory_space<vmem>>, vector<4x12xf32>,
    return
  }
}

</mosaic_0001>

<llo_original>
// kernel: tile.8
$region0: #{tile.8}
  #allocation0 [shape = 's32[1]{0}', space=sflag, size = 0x4, scoped, tag = 'scoped memory for tile.8']
  %s0 = inlined_call_operand.vmem [shape: f32[4], index: 0, kind: input, shape index: {}]
  %s1 = inlined_call_operand.vmem [shape: f32[3,4], index: 1, kind: output, shape index: {}]
  // Predicated region
  $region2: #{tile.8} parent=0 // pred_check
    _
  $region3: #{tile.8} parent=0 // pred_check_branch
    %3 = sbr.rel (0) target = $region5
  $region4: #{tile.8} parent=0 // pred_region
    _
  $region5: #{tile.8} parent=0 // pred_fallthru
    _
  %v4 = vld [vmem:[%s0] ss:$0 sm:$0xff]
  %5 = vst [vmem:[%s1] sm:$0xf] %v4

// kernel: gen_base_anchors_pallas.1
$region0: #{gen_base_anchors_pallas.1}
  #allocation0 [shape = 'u32[]', space=smem, size = 0x4, offset = 0x4, fixed_abs, tag = 'smem constant byte address 0x4 - core index']
  #allocation1 [shape = 'u32[144,128]{1,0:T(1,128)}', space=vmem, size = 0x12000, scoped, tag = 'internal scratch']
  %s0 = inlined_call_operand.vmem [shape: f32[2,12], index: 0, kind: input, shape index: {}]
  %s1 = inlined_call_operand.hbm [shape: f32[4,12], index: 1, kind: output, shape index: {}]
  %s2 = sld [smem:[#allocation0]]
  $region14: #{gen_base_anchors_pallas.1} parent=0
    _
  %s4 = ssub.s32 1, %s2
  %s5 = scalar_select 0, %s4, %s2
  $region1: #{gen_base_anchors_pallas.1} parent=0
    #allocation2 [shape = 'u8[2048]{0}', space=vmem, size = 0x800, scoped, tag = 'output window, operand 0, single buffered']
    #allocation3 [shape = 's32[1]{0}', space=sflag, size = 0x4, scoped, tag = 'scoped memory for gen_base_anchors_pallas.1']
    %6 = vsyncpa [#allocation3], 0
    // Predicated region
    $region2: #{gen_base_anchors_pallas.1} parent=1 // pred_check
      _
    $region3: #{gen_base_anchors_pallas.1} parent=1 // pred_check_branch
      %8 = sbr.rel (0) target = $region5
    $region4: #{gen_base_anchors_pallas.1} parent=1 // pred_region
      _
    $region5: #{gen_base_anchors_pallas.1} parent=1 // pred_fallthru
      _
    %v9 = vld [vmem:[%s0] sm:$0x1]
    %v10 = vld [vmem:[%s0 + $0x1] sm:$0x1]
    %v11 = vrsqrt.pop %v9
    %v12 = vmul.f32 %v9, %v11
    %vm13 = vcmp.eq.f32.partialorder %v9, inf
    %v14 = vsel %vm13, %v9, %v12
    %vm15 = vcmp.eq.f32.partialorder %v9, 0.0
    %v16 = vand.u32 %v9, 2147483648
    %v17 = vsel %vm15, %v16, %v14
    %v18 = vrsqrt.pop %v9
    %v19 = vmul.f32 %v18, 4.0
    %v20 = vmul.f32 %v19, %v10
    %v21 = vmul.f32 %v17, 4.0
    %v22 = vmul.f32 %v21, %v10
    %v23 = vmul.f32 %v20, 0.5
    %v24 = vsub.f32 %v23, 0.5
    %v25 = vmul.f32 %v22, 0.5
    %v26 = vsub.f32 %v25, 0.5
    %v27 = vsub.f32 1.5, %v24
    %v28 = vsub.f32 1.5, %v26
    %v29 = vadd.f32 %v24, 1.5
    %v30 = vadd.f32 %v26, 1.5
    %v32 = vrot.slane %v28, 7
    %v35 = vrot.slane %v29, 6
    %v38 = vrot.slane %v30, 5
    %vm40 = vcmask 1040384
    %v41 = vsel %vm40, %v27, %v32
    %vm42 = vcmask 1041408
    %v43 = vsel %vm42, %v41, %v35
    %vm44 = vcmask 1042432
    %v45 = vsel %vm44, %v43, %v38
    %v46 = vround.ne.pseudo %v45
    %vm47 = vcmask 93184
    %48 = vst.msk [vmem:[#allocation2] sm:$0xf] %vm47, %v46
    // Predicated region
    $region6: #{gen_base_anchors_pallas.1} parent=1 // pred_check
      _
    $region7: #{gen_base_anchors_pallas.1} parent=1 // pred_check_branch
      %50 = sbr.rel (0) target = $region9
    $region8: #{gen_base_anchors_pallas.1} parent=1 // pred_region
      %s52 = ssub.s32 64, 64
      %53 = vsyncadd [#allocation3], %s52
      %s55 = sshll.u32 [#allocation2], 4
      %s56 = int_to_ptr.vmem [resolvable:$true] %s55
      %58 = dma.vmem_to_hbm [thread:$0]  %s56, 64, %s1, [#allocation3]
    $region9: #{gen_base_anchors_pallas.1} parent=1 // pred_fallthru
      _
    // Predicated region
    $region10: #{gen_base_anchors_pallas.1} parent=1 // pred_check
      _
    $region11: #{gen_base_anchors_pallas.1} parent=1 // pred_check_branch
      %60 = sbr.rel (0) target = $region13
    $region12: #{gen_base_anchors_pallas.1} parent=1 // pred_region
      %61 = dma.done [#allocation3], 64
    $region13: #{gen_base_anchors_pallas.1} parent=1 // pred_fallthru
      _
    %62 = vsyncpa [#allocation3], 1

</llo_original>
